<compile_context>
chip_gen: v7x
topology: tpu7x:2x2x1
jax: 0.10.0
libtpu: 0.0.40
codegen_flags: <defaults>
</compile_context>

<pallas_src>
import functools
import math

import jax
import jax.numpy as jnp
from jax.experimental import pallas as pl
from jax.experimental.pallas import tpu as pltpu


def _rescale_kernel(scale_ref, x_ref, o_ref):
    # scale_ref: (1,) float32 in SMEM; x_ref/o_ref: (tile_rows, lanes) in VMEM.
    scale = scale_ref[0]
    o_ref[...] = (x_ref[...].astype(jnp.float32) * scale).astype(o_ref.dtype)


def _choose_flat_shape(shape):
    """Pick a lane-dense (rows, lanes) flattening of `shape`."""
    total = math.prod(shape)
    for lanes in (1024, 512, 256, 128):
        if total % lanes == 0:
            return total // lanes, lanes
    # Shape-safe fallback: keep the original last dim as the lane dim.
    return total // shape[-1], shape[-1]


@functools.partial(jax.jit, static_argnames=())
def rescale(x: jax.Array, rescale_factor) -> jax.Array:
    """Equivalent of Rescale(rescale_factor)(x) for a floating-point tensor."""
    # TODO(synk): integer inputs would need PyTorch's int*float->float promotion;
    # this kernel assumes a floating-point input dtype.
    orig_shape = x.shape
    rows, lanes = _choose_flat_shape(orig_shape)
    x2d = x.reshape(rows, lanes)  # free plumbing for elementwise math

    tile_rows = rows if rows <= 512 else 512
    grid = (pl.cdiv(rows, tile_rows),)

    scale = jnp.asarray(rescale_factor, dtype=jnp.float32).reshape((1,))

    out2d = pl.pallas_call(
        _rescale_kernel,
        out_shape=jax.ShapeDtypeStruct((rows, lanes), x.dtype),
        grid=grid,
        in_specs=[
            pl.BlockSpec(memory_space=pltpu.SMEM),                  # scale
            pl.BlockSpec((tile_rows, lanes), lambda i: (i, 0)),     # x tile
        ],
        out_specs=pl.BlockSpec((tile_rows, lanes), lambda i: (i, 0)),
        compiler_params=pltpu.CompilerParams(
            dimension_semantics=("parallel",),
        ),
    )(scale, x2d)

    return out2d.reshape(orig_shape)


if __name__ == "__main__":
    key = jax.random.PRNGKey(0)
    x = jax.random.normal(key, (2, 4, 16, 16), dtype=jnp.float32)

    rescale_factor = 1.0 / 255.0  # deterministic "module parameter"

    out = rescale(x, rescale_factor)
    out = jax.block_until_ready(out)

    expected = x * rescale_factor
    assert out.shape == x.shape and out.dtype == x.dtype
    assert jnp.allclose(out, expected, rtol=1e-6, atol=1e-6)

    print("KERNEL_OK")
</pallas_src>

<mosaic_0001>
module attributes {stable_mosaic.version = 11 : i64} {
  func.func @_rescale_kernel(%arg0: i32, %arg1: memref<1xf32, #tpu.memory_space<smem>>, %arg2: memref<2x1024xf32, #tpu.memory_space<vmem>>, %arg3: memref<2x1024xf32, #tpu.memory_space<vmem>>) attributes {dimension_semantics = [#tpu.dimension_semantics<parallel>], iteration_bounds = array<i64: 1>, scalar_prefetch = 0 : i64, scratch_operands = 0 : i64, tpu.core_type = #tpu.core_type<tc>, window_params = [{transform_indices = @transform_0, window_bounds = array<i64: 1>}, {transform_indices = @transform_1, window_bounds = array<i64: 2, 1024>}, {transform_indices = @transform_2, window_bounds = array<i64: 2, 1024>}]} {
    %c0 = arith.constant 0 : index
    %0 = memref.load %arg1[%c0] : memref<1xf32, #tpu.memory_space<smem>>
    %c0_0 = arith.constant 0 : index
    %c0_1 = arith.constant 0 : index
    %1 = vector.load %arg2[%c0_0, %c0_1] : memref<2x1024xf32, #tpu.memory_space<vmem>>, vector<2x1024xf32>
    %2 = vector.broadcast %0 : f32 to vector<2x1024xf32>
    %3 = arith.mulf %1, %2 : vector<2x1024xf32>
    %c0_2 = arith.constant 0 : index
    %c0_3 = arith.constant 0 : index
    %4 = vector.load %arg3[%c0_2, %c0_3] : memref<2x1024xf32, #tpu.memory_space<vmem>>, vector<2x1024xf32>
    tpu.vector_store %arg3[%c0_2, %c0_3], %3 {strides = array<i32>} : memref<2x1024xf32, #tpu.memory_space<vmem>>, vector<2x1024xf32>,
    return
  }
  func.func @transform_0(%arg0: i32) -> i32 {
    %c0_i32 = arith.constant 0 : i32
    %c0_i32_0 = arith.constant 0 : i32
    return %c0_i32 : i32
  }
  func.func @transform_1(%arg0: i32) -> (i32, i32) {
    %c0_i32 = arith.constant 0 : i32
    %c0_i32_0 = arith.constant 0 : i32
    return %arg0, %c0_i32 : i32, i32
  }
  func.func @transform_2(%arg0: i32) -> (i32, i32) {
    %c0_i32 = arith.constant 0 : i32
    %c0_i32_0 = arith.constant 0 : i32
    return %arg0, %c0_i32 : i32, i32
  }
}

</mosaic_0001>

<llo_original>
// kernel: rescale.1
$region0: #{rescale.1}
  #allocation0 [shape = 'u32[]', space=smem, size = 0x4, offset = 0x4, fixed_abs, tag = 'smem constant byte address 0x4 - core index']
  #allocation1 [shape = 'u32[144,128]{1,0:T(1,128)}', space=vmem, size = 0x12000, scoped, tag = 'internal scratch']
  #allocation2 [shape = 'f32[1]{0:T(128)S(6)}', space=smem, size = 0x200, scoped, tag = 'scoped memory for rescale.1']
  %s0 = inlined_call_operand.<no memory space> [shape: f32[1], index: 0, kind: input, shape index: {}]
  %s1 = inlined_call_operand.vmem [shape: f32[2,1024], index: 1, kind: input, shape index: {}]
  %s2 = inlined_call_operand.vmem [shape: f32[2,1024], index: 2, kind: output, shape index: {}]
  %s3 = sld [smem:[#allocation0]]
  $region18: #{rescale.1} parent=0
    _
  %s5 = ssub.s32 1, %s3
  %s6 = scalar_select 0, %s5, %s3
  %7 = sst [smem:[#allocation2]] %s0
  // Predicated region
  $region2: #{rescale.1} parent=0 // pred_check
    _
  $region3: #{rescale.1} parent=0 // pred_check_branch
    %9 = sbr.rel (0) target = $region5
  $region4: #{rescale.1} parent=0 // pred_region
    _
  $region5: #{rescale.1} parent=0 // pred_fallthru
    _
  // Predicated region
  $region6: #{rescale.1} parent=0 // pred_check
    _
  $region7: #{rescale.1} parent=0 // pred_check_branch
    %11 = sbr.rel (0) target = $region9
  $region8: #{rescale.1} parent=0 // pred_region
    _
  $region9: #{rescale.1} parent=0 // pred_fallthru
    _
  %s12 = sld [smem:[#allocation2]]
  %v13 = vld [vmem:[%s1] sm:$0xff]
  %v14 = vld [vmem:[%s1 + $0x8] sm:$0xff]
  %v15 = vstv %s12
  %v16 = vmul.f32 %v13, %v15
  %v17 = vmul.f32 %v14, %v15
  %18 = vst [vmem:[%s2] sm:$0xff] %v16
  %19 = vst [vmem:[%s2 + $0x8] sm:$0xff] %v17
  // Predicated region
  $region10: #{rescale.1} parent=0 // pred_check
    _
  $region11: #{rescale.1} parent=0 // pred_check_branch
    %21 = sbr.rel (0) target = $region13
  $region12: #{rescale.1} parent=0 // pred_region
    _
  $region13: #{rescale.1} parent=0 // pred_fallthru
    _
  // Predicated region
  $region14: #{rescale.1} parent=0 // pred_check
    _
  $region15: #{rescale.1} parent=0 // pred_check_branch
    %23 = sbr.rel (0) target = $region17
  $region16: #{rescale.1} parent=0 // pred_region
    _
  $region17: #{rescale.1} parent=0 // pred_fallthru
    _

</llo_original>
